<compile_context>
chip_gen: v7x
topology: tpu7x:2x2x1
jax: 0.10.0
libtpu: 0.0.40
codegen_flags: <defaults>
</compile_context>

<pallas_src>
import functools

import jax
import jax.numpy as jnp
import numpy as np
from jax.experimental import pallas as pl
from jax.experimental.pallas import tpu as pltpu


def _round_up(x, m):
    return (x + m - 1) // m * m


def _tpu_vmem_capacity_bytes():
    try:
        return int(pltpu.get_tpu_info().vmem_capacity_bytes)
    except Exception:
        return 64 << 20  # conservative default: v7x physical per-core VMEM


def _vmem_limit_bytes():
    cap = _tpu_vmem_capacity_bytes()
    if cap >= (128 << 20):      # v5e / v6e: 128 MiB physical
        return 64 << 20
    return min(40 << 20, (cap * 5) // 8)   # v7x: ~40 MiB, leave headroom


def _choose_tile_p(P, K, max_tile_p=None):
    """Pick (tile_p, P_pad): tile_p a multiple of 128, P_pad a multiple of tile_p.

    The budget keeps the in-kernel (K, tile_p) bf16 one-hot plus its compare /
    broadcast intermediates well inside the scoped VMEM of the current TPU
    generation while leaving room for the double-buffered input tiles.
    """
    vmem_cap = _tpu_vmem_capacity_bytes()
    onehot_budget = (24 << 20) if vmem_cap >= (128 << 20) else (12 << 20)
    per_elem = 6  # ~bytes of live K*tile_p data (bf16 mask + int compare slack)
    cap = max(128, (onehot_budget // (per_elem * max(K, 1))) // 128 * 128)
    if cap >= 1024:
        cap = cap // 512 * 512      # prefer 512-wide MXU contractions
    if max_tile_p is not None:
        cap = min(cap, max(128, (max_tile_p // 128) * 128))
    P128 = _round_up(P, 128)
    cap = min(cap, P128)

    # Largest multiple of 128 that divides the 128-padded length (always >=128).
    tile_p = 128
    t = cap
    while t >= 128:
        if P128 % t == 0:
            tile_p = t
            break
        t -= 128
    # Poor divisor: pad a little more and take the full-budget tile instead.
    if tile_p * 2 <= cap:
        tile_p = cap
    P_pad = _round_up(P, tile_p)
    return tile_p, P_pad


def _accumulate_kernel(x_ref, lab_ref, out_ref, xaug_ref, *,
                       num_superpixels, compute_dtype):
    # x_ref:    (1, C, TP)      color tile, channels on sublanes, pixels on lanes
    # lab_ref:  (1, 1, TP)      int32 labels (sentinel K on padded pixels)
    # out_ref:  (1, 1, C+1, K)  f32 partial sums (rows 0..C-1) and counts (row C)
    # xaug_ref: (C+1, TP)       compute_dtype scratch; row C is a persistent ones row
    t = pl.program_id(2)
    C = x_ref.shape[1]
    TP = x_ref.shape[2]
    K = num_superpixels

    @pl.when(t == 0)
    def _():
        out_ref[...] = jnp.zeros_like(out_ref)
        # Counts row: written once per reduction (trivial), persists across tiles.
        xaug_ref[C:C + 1, :] = jnp.ones((1, TP), compute_dtype)

    # Stage the color tile next to the ones row (no per-step concatenate).
    xaug_ref[0:C, :] = x_ref[0].astype(compute_dtype)

    lab = lab_ref[0]                                            # (1, TP) int32
    k_col = jax.lax.broadcasted_iota(jnp.int32, (K, 1), 0)      # (K, 1): tiny iota
    one_hot = (lab == k_col).astype(compute_dtype)              # (K, TP), P on lanes

    # Single MXU pass contracting the pixel (lane) axis: fused sums + counts.
    part = jax.lax.dot_general(
        xaug_ref[...], one_hot,
        dimension_numbers=(((1,), (1,)), ((), ())),
        preferred_element_type=jnp.float32)                     # (C+1, K) f32
    out_ref[0, 0] += part


def _paint_kernel(means_ref, lab_ref, o_ref, *, num_superpixels, compute_dtype):
    # means_ref: (1, C, K) f32 per-superpixel mean colors
    # lab_ref:   (1, 1, TP) int32
    # o_ref:     (1, C, TP) lane-dense output tile
    K = num_superpixels

    lab = lab_ref[0]                                            # (1, TP)
    k_col = jax.lax.broadcasted_iota(jnp.int32, (K, 1), 0)      # (K, 1)
    one_hot = (lab == k_col).astype(compute_dtype)              # (K, TP)
    means = means_ref[0].astype(compute_dtype)                  # (C, K)

    out = jax.lax.dot_general(
        means, one_hot,
        dimension_numbers=(((1,), (0,)), ((), ())),
        preferred_element_type=jnp.float32)                     # (C, TP)
    o_ref[0] = out.astype(o_ref.dtype)


def superpixel_color(x_nchw, suplabel, seed_h, seed_w, seed_level, *,
                     compute_dtype=jnp.bfloat16, max_tile_p=None):
    """Pallas implementation of SuperpixelColor.forward.

    x_nchw:   (N, C, H, W) float array
    suplabel: (N, H, W) (or (N, 1, H, W)) int array, labels in [0, seed_h*seed_w)
    """
    del seed_level  # TODO(synk): opaque to the CUDA extension; unused here.

    N, C, H, W = x_nchw.shape
    P = H * W
    K = int(seed_h) * int(seed_w)

    # Pure reshapes only -- no transposes, no extra HBM round trips.
    x = x_nchw.reshape(N, C, P)
    lab = jnp.reshape(suplabel, (N, 1, P)).astype(jnp.int32)

    tile_p, P_pad = _choose_tile_p(P, K, max_tile_p)
    if P_pad != P:
        pad = P_pad - P
        x = jnp.pad(x, ((0, 0), (0, 0), (0, pad)))
        # Sentinel label K is outside [0, K): padded pixels hit no one-hot row,
        # so they contribute nothing to sums/counts and their paint is sliced off.
        lab = jnp.pad(lab, ((0, 0), (0, 0), (0, pad)), constant_values=K)
    T = P_pad // tile_p

    # v7x megacore: when N alone cannot occupy both TensorCores, split the
    # phase-1 P reduction into S parallel partial accumulations.
    S = 2 if (N % 2 == 1 and T % 2 == 0) else 1
    T_s = T // S

    vmem_limit = _vmem_limit_bytes()

    # Phase 1: per-image, per-split partial sums + counts, reduced over P tiles.
    partial = pl.pallas_call(
        functools.partial(_accumulate_kernel, num_superpixels=K,
                          compute_dtype=compute_dtype),
        out_shape=jax.ShapeDtypeStruct((N, S, C + 1, K), jnp.float32),
        grid=(N, S, T_s),
        in_specs=[
            pl.BlockSpec((1, C, tile_p), lambda n, s, t: (n, 0, s * T_s + t)),
            pl.BlockSpec((1, 1, tile_p), lambda n, s, t: (n, 0, s * T_s + t)),
        ],
        out_specs=pl.BlockSpec((1, 1, C + 1, K), lambda n, s, t: (n, s, 0, 0)),
        scratch_shapes=[pltpu.VMEM((C + 1, tile_p), compute_dtype)],
        compiler_params=pltpu.CompilerParams(
            dimension_semantics=("parallel", "parallel", "arbitrary"),
            vmem_limit_bytes=vmem_limit),
    )(x, lab)

    # Tiny combine + exact f32 division in plain XLA: (N, S, C+1, K) is a few KB.
    acc = jnp.sum(partial, axis=1)                      # (N, C+1, K)
    sums = acc[:, :C, :]
    counts = jnp.maximum(acc[:, C:, :], 1.0)            # empty superpixels -> 0 mean
    means = sums / counts                               # (N, C, K) f32

    # Phase 2: paint every pixel with its superpixel mean (lane-dense stores).
    out = pl.pallas_call(
        functools.partial(_paint_kernel, num_superpixels=K,
                          compute_dtype=compute_dtype),
        out_shape=jax.ShapeDtypeStruct((N, C, P_pad), x_nchw.dtype),
        grid=(N, T),
        in_specs=[
            pl.BlockSpec((1, C, K), lambda n, t: (n, 0, 0)),
            pl.BlockSpec((1, 1, tile_p), lambda n, t: (n, 0, t)),
        ],
        out_specs=pl.BlockSpec((1, C, tile_p), lambda n, t: (n, 0, t)),
        compiler_params=pltpu.CompilerParams(
            dimension_semantics=("parallel", "parallel"),
            vmem_limit_bytes=vmem_limit),
    )(means, lab)

    if P_pad != P:
        out = out[:, :, :P]
    return out.reshape(N, C, H, W)


class SuperpixelColor:
    """Mirror of the PyTorch module: holds the superpixel label map + seed grid."""

    def __init__(self, suplabel, seed_h, seed_w, seed_level,
                 compute_dtype=jnp.bfloat16):
        self.superlabel = suplabel
        self.seed_h = seed_h
        self.seed_w = seed_w
        self.seed_level = seed_level
        self.compute_dtype = compute_dtype

    def __call__(self, x, *, max_tile_p=None):
        return superpixel_color(x, self.superlabel, self.seed_h, self.seed_w,
                                self.seed_level,
                                compute_dtype=self.compute_dtype,
                                max_tile_p=max_tile_p)


def _reference(x_nchw, suplabel, K):
    """Pure numpy reference: per-superpixel mean color painted back."""
    x = np.asarray(x_nchw, dtype=np.float32)
    lab = np.asarray(suplabel).reshape(x.shape[0], -1)
    N, C, H, W = x.shape
    out = np.zeros_like(x)
    for n in range(N):
        l = lab[n]
        xf = x[n].reshape(C, -1)
        of = out[n].reshape(C, -1)
        for k in range(K):
            m = l == k
            if m.any():
                of[:, m] = xf[:, m].mean(axis=1)[:, None]
    return out


if __name__ == "__main__":
    key = jax.random.PRNGKey(0)

    # Case 1: N=2, C=4, 16x16, 4x4 seed grid.  max_tile_p=128 forces T=2 so the
    # cross-tile accumulation pipeline is exercised even at this toy size.
    N, C, H, W = 2, 4, 16, 16
    seed_h, seed_w, seed_level = 4, 4, 1
    K = seed_h * seed_w
    kx, kl = jax.random.split(key)
    x = jax.random.normal(kx, (N, C, H, W), dtype=jnp.float32)

    hh = (np.arange(H) // (H // seed_h))[:, None]
    ww = (np.arange(W) // (W // seed_w))[None, :]
    base = np.broadcast_to((hh * seed_w + ww).astype(np.int32), (N, H, W)).copy()
    noise = jax.random.randint(kl, (N, H, W), 0, K, dtype=jnp.int32)
    flip = jax.random.bernoulli(kl, 0.1, (N, H, W))
    suplabel = jnp.where(flip, noise, jnp.asarray(base))
    ref = _reference(x, suplabel, K)

    # Default bf16 MXU path (one-hot exact in bf16, f32 accumulation, exact f32
    # division): only x / means rounding contributes error.
    module = SuperpixelColor(suplabel, seed_h, seed_w, seed_level)
    out = jax.block_until_ready(module(x, max_tile_p=128))
    np.testing.assert_allclose(np.asarray(out), ref, rtol=3e-2, atol=3e-2)

    # Full-precision path, tight tolerance.
    out_f32 = jax.block_until_ready(
        superpixel_color(x, suplabel, seed_h, seed_w, seed_level,
                         compute_dtype=jnp.float32, max_tile_p=128))
    np.testing.assert_allclose(np.asarray(out_f32), ref, rtol=1e-5, atol=1e-5)

    # Case 2: odd batch + non-128-multiple spatial size -> exercises the P
    # padding with the sentinel label and the 2-way megacore reduction split.
    N2, C2, H2, W2 = 1, 3, 15, 15
    sh2, sw2 = 3, 3
    K2 = sh2 * sw2
    kx2, kl2 = jax.random.split(kl)
    x2 = jax.random.normal(kx2, (N2, C2, H2, W2), dtype=jnp.float32)
    lab2 = jax.random.randint(kl2, (N2, H2, W2), 0, K2, dtype=jnp.int32)
    ref2 = _reference(x2, lab2, K2)
    out2 = jax.block_until_ready(
        superpixel_color(x2, lab2, sh2, sw2, 1,
                         compute_dtype=jnp.float32, max_tile_p=128))
    np.testing.assert_allclose(np.asarray(out2), ref2, rtol=1e-5, atol=1e-5)

    print("KERNEL_OK")
</pallas_src>

<mosaic_0001>
module attributes {stable_mosaic.version = 11 : i64} {
  func.func @_accumulate_kernel(%arg0: i32, %arg1: i32, %arg2: i32, %arg3: memref<1x4x128xf32, #tpu.memory_space<vmem>>, %arg4: memref<1x1x128xi32, #tpu.memory_space<vmem>>, %arg5: memref<1x1x5x16xf32, #tpu.memory_space<vmem>>, %arg6: memref<5x128xbf16, #tpu.memory_space<vmem>>) attributes {dimension_semantics = [#tpu.dimension_semantics<parallel>, #tpu.dimension_semantics<parallel>, #tpu.dimension_semantics<arbitrary>], iteration_bounds = array<i64: 2, 1, 2>, scalar_prefetch = 0 : i64, scratch_operands = 1 : i64, tpu.core_type = #tpu.core_type<tc>, window_params = [{transform_indices = @transform_0, window_bounds = array<i64: 1, 4, 128>}, {transform_indices = @transform_1, window_bounds = array<i64: 1, 1, 128>}, {transform_indices = @transform_2, window_bounds = array<i64: 1, 1, 5, 16>}]} {
    %c0_i32 = arith.constant 0 : i32
    %0 = arith.cmpi eq, %arg2, %c0_i32 : i32
    %1 = arith.extui %0 : i1 to i32
    %c0_i32_0 = arith.constant 0 : i32
    %2 = arith.cmpi ne, %1, %c0_i32_0 : i32
    scf.if %2 {
      %cst_18 = arith.constant 0.000000e+00 : f32
      %24 = vector.broadcast %cst_18 : f32 to vector<1x1x5x16xf32>
      %c0_19 = arith.constant 0 : index
      %c0_20 = arith.constant 0 : index
      %c0_21 = arith.constant 0 : index
      %c0_22 = arith.constant 0 : index
      %25 = vector.load %arg5[%c0_19, %c0_20, %c0_21, %c0_22] : memref<1x1x5x16xf32, #tpu.memory_space<vmem>>, vector<1x1x5x16xf32>
      tpu.vector_store %arg5[%c0_19, %c0_20, %c0_21, %c0_22], %24 {strides = array<i32>} : memref<1x1x5x16xf32, #tpu.memory_space<vmem>>, vector<1x1x5x16xf32>,
      %cst_23 = arith.constant 1.000000e+00 : bf16
      %26 = vector.broadcast %cst_23 : bf16 to vector<1x128xbf16>
      %c4 = arith.constant 4 : index
      %c0_24 = arith.constant 0 : index
      %27 = vector.load %arg6[%c4, %c0_24] : memref<5x128xbf16, #tpu.memory_space<vmem>>, vector<1x128xbf16>
      tpu.vector_store %arg6[%c4, %c0_24], %26 {strides = array<i32>} : memref<5x128xbf16, #tpu.memory_space<vmem>>, vector<1x128xbf16>,
    } else {
    }
    %c0 = arith.constant 0 : index
    %c0_1 = arith.constant 0 : index
    %c0_2 = arith.constant 0 : index
    %3 = vector.load %arg3[%c0, %c0_1, %c0_2] : memref<1x4x128xf32, #tpu.memory_space<vmem>>, vector<1x4x128xf32>
    %4 = vector.shape_cast %3 : vector<1x4x128xf32> to vector<4x128xf32>
    %5 = arith.truncf %4 : vector<4x128xf32> to vector<4x128xbf16>
    %c0_3 = arith.constant 0 : index
    %c0_4 = arith.constant 0 : index
    %6 = vector.load %arg6[%c0_3, %c0_4] : memref<5x128xbf16, #tpu.memory_space<vmem>>, vector<4x128xbf16>
    tpu.vector_store %arg6[%c0_3, %c0_4], %5 {strides = array<i32>} : memref<5x128xbf16, #tpu.memory_space<vmem>>, vector<4x128xbf16>,
    %c0_5 = arith.constant 0 : index
    %c0_6 = arith.constant 0 : index
    %c0_7 = arith.constant 0 : index
    %7 = vector.load %arg4[%c0_5, %c0_6, %c0_7] : memref<1x1x128xi32, #tpu.memory_space<vmem>>, vector<1x1x128xi32>
    %8 = vector.shape_cast %7 : vector<1x1x128xi32> to vector<1x128xi32>
    %9 = tpu.iota {dimensions = array<i32: 0>} : vector<16x1xi32>
    %10 = vector.broadcast %8 : vector<1x128xi32> to vector<16x128xi32>
    %11 = vector.broadcast %9 : vector<16x1xi32> to vector<16x128xi32>
    %12 = arith.cmpi eq, %10, %11 : vector<16x128xi32>
    %13 = arith.extui %12 : vector<16x128xi1> to vector<16x128xi32>
    %14 = arith.sitofp %13 : vector<16x128xi32> to vector<16x128xf32>
    %15 = arith.truncf %14 : vector<16x128xf32> to vector<16x128xbf16>
    %c0_8 = arith.constant 0 : index
    %c0_9 = arith.constant 0 : index
    %16 = vector.load %arg6[%c0_8, %c0_9] : memref<5x128xbf16, #tpu.memory_space<vmem>>, vector<5x128xbf16>
    %cst = arith.constant dense<0.000000e+00> : vector<5x16xf32>
    %17 = tpu.matmul %16, %15, %cst {dimension_numbers = #tpu.dot_dimension_numbers<[1], [1], [0], [0], [0, 0, 1, 0], [], []>} : vector<5x128xbf16>, vector<16x128xbf16>, vector<5x16xf32> -> vector<5x16xf32>
    %c0_10 = arith.constant 0 : index
    %c0_11 = arith.constant 0 : index
    %c0_12 = arith.constant 0 : index
    %c0_13 = arith.constant 0 : index
    %18 = vector.load %arg5[%c0_10, %c0_11, %c0_12, %c0_13] : memref<1x1x5x16xf32, #tpu.memory_space<vmem>>, vector<1x1x5x16xf32>
    %19 = vector.shape_cast %18 : vector<1x1x5x16xf32> to vector<5x16xf32>
    %20 = arith.addf %19, %17 : vector<5x16xf32>
    %c0_14 = arith.constant 0 : index
    %c0_15 = arith.constant 0 : index
    %c0_16 = arith.constant 0 : index
    %c0_17 = arith.constant 0 : index
    %21 = vector.load %arg5[%c0_14, %c0_15, %c0_16, %c0_17] : memref<1x1x5x16xf32, #tpu.memory_space<vmem>>, vector<1x1x5x16xf32>
    %22 = vector.shape_cast %21 : vector<1x1x5x16xf32> to vector<5x16xf32>
    %23 = vector.shape_cast %20 : vector<5x16xf32> to vector<1x1x5x16xf32>
    tpu.vector_store %arg5[%c0_14, %c0_15, %c0_16, %c0_17], %23 {strides = array<i32>} : memref<1x1x5x16xf32, #tpu.memory_space<vmem>>, vector<1x1x5x16xf32>,
    return
  }
  func.func @transform_0(%arg0: i32, %arg1: i32, %arg2: i32) -> (i32, i32, i32) {
    %c2_i32 = arith.constant 2 : i32
    %0 = arith.muli %arg1, %c2_i32 : i32
    %1 = arith.addi %0, %arg2 : i32
    %c0_i32 = arith.constant 0 : i32
    %c0_i32_0 = arith.constant 0 : i32
    return %arg0, %c0_i32, %1 : i32, i32, i32
  }
  func.func @transform_1(%arg0: i32, %arg1: i32, %arg2: i32) -> (i32, i32, i32) {
    %c2_i32 = arith.constant 2 : i32
    %0 = arith.muli %arg1, %c2_i32 : i32
    %1 = arith.addi %0, %arg2 : i32
    %c0_i32 = arith.constant 0 : i32
    %c0_i32_0 = arith.constant 0 : i32
    return %arg0, %c0_i32, %1 : i32, i32, i32
  }
  func.func @transform_2(%arg0: i32, %arg1: i32, %arg2: i32) -> (i32, i32, i32, i32) {
    %c0_i32 = arith.constant 0 : i32
    %c0_i32_0 = arith.constant 0 : i32
    %c0_i32_1 = arith.constant 0 : i32
    return %arg0, %arg1, %c0_i32, %c0_i32_0 : i32, i32, i32, i32
  }
}

</mosaic_0001>

<llo_original>
// kernel: tpu_custom_call.1
$region0: #{tpu_custom_call.1}
  #allocation0 [shape = 'u32[]', space=smem, size = 0x4, offset = 0x4, fixed_abs, tag = 'smem constant byte address 0x4 - core index']
  #allocation1 [shape = 'u32[144,128]{1,0:T(1,128)}', space=vmem, size = 0x12000, scoped, tag = 'internal scratch']
  #allocation2 [shape = 'bf16[5,128]{1,0:T(8,128)(2,1)}', space=vmem, size = 0x800, scoped, tag = 'scratch operand']
  %s0 = inlined_call_operand.hbm [shape: f32[2,4,256], index: 0, kind: input, shape index: {}]
  %s1 = inlined_call_operand.hbm [shape: s32[2,1,256], index: 1, kind: input, shape index: {}]
  %s2 = inlined_call_operand.vmem [shape: f32[2,1,5,16], index: 2, kind: output, shape index: {}]
  %s3 = sld [smem:[#allocation0]]
  $region53: #{tpu_custom_call.1} parent=0
    _
  %s5 = ssub.s32 1, %s3
  %s6 = scalar_select 0, %s5, %s3
  $region1: #{tpu_custom_call.1} parent=0
    #allocation3 [shape = 'u8[4096]{0}', space=vmem, size = 0x1000, scoped, tag = 'input window, operand 0']
    #allocation4 [shape = 's32[2]{0}', space=sflag, size = 0x8, scoped, tag = 'scoped memory for tpu_custom_call.1']
    #allocation5 [shape = 'u8[1024]{0}', space=vmem, size = 0x400, scoped, tag = 'input window, operand 1']
    #allocation6 [shape = 's32[2]{0}', space=sflag, size = 0x8, scoped, tag = 'scoped memory for tpu_custom_call.1']
    %7 = vsyncpa [#allocation4], 0
    %s8 = scalar_lea.sflag [#allocation4], 1
    %9 = vsyncpa %s8, 0
    %10 = vsyncpa [#allocation6], 0
    %s11 = scalar_lea.sflag [#allocation6], 1
    %12 = vsyncpa %s11, 0
    loop: start=0, step=1, limit=6
    $region2: #{tpu_custom_call.1} parent=1 // loop_pre_header
      _
    $region3: #{tpu_custom_call.1} parent=1 // loop_header
      %s14 = sphi 0, %s18
      %p15 = scmp.ge.s32.totalorder %s14, 6
      %s21 = sphi 0, %s40
      %s22 = sphi 0, %s36
      %s23 = sphi 0, %s32
      %s24 = sphi 0, %s21
      %s25 = sphi 0, %s22
      %s26 = sphi 0, %s23
      %s27 = sphi 0, %s24
      %s28 = sphi 0, %s25
      %s29 = sphi 0, %s26
      %s49 = sphi 0, %s51
      %s52 = sphi 0, %s49
      %s53 = sphi 0, %s52
      %s69 = sphi 0, %s53
      %s81 = sphi 0, %s83
      %s84 = sphi 0, %s81
      %s85 = sphi 0, %s84
      %s101 = sphi 0, %s85
      %s109 = sphi 0, %s111
      %s112 = sphi 0, %s109
      %s113 = sphi 0, %s112
      %s129 = sphi 0, %s113
    $region4: #{tpu_custom_call.1} parent=1 // loop_header_branch
      %17 = sbr.rel (%p15) target = $region8
    $region5: #{tpu_custom_call.1} parent=1 // loop_body
      %s19 = ssub.s32 %s14, 1
      %s20 = ssub.s32 %s14, 2
      %s30 = sadd.s32 1, %s23
      %p31 = scmp.ge.s32.totalorder %s30, 2
      %s32 = scalar_select %p31, 0, %s30
      %s33 = sadd.s32 1, %s22
      %s34 = scalar_select %p31, %s33, %s22
      %p35 = scmp.ge.s32.totalorder %s34, 1
      %s36 = scalar_select %p35, 0, %s34
      %s37 = sadd.s32 1, %s21
      %s38 = scalar_select %p35, %s37, %s21
      %p39 = scmp.ge.s32.totalorder %s38, 2
      %s40 = scalar_select %p39, 0, %s38
      %s41 = smul.u32 %s22, 2
      %s42 = sadd.s32 %s41, %s23
      %s43 = smul.u32 %s36, 2
      %s44 = sadd.s32 %s43, %s32
      %s45 = ssub.s32 %s21, %s40
      %s46 = ssub.s32 %s42, %s44
      %s47 = sor.u32 %s45, %s46
      %p48 = scmp.eq.s32.totalorder %s47, 0
      %s50 = sadd.s32 %s49, 1
      %s51 = scalar_select %p48, %s49, %s50
      %p54 = pneg %p48
      %p55 = scmp.eq.s32.totalorder %s14, 3
      %p56 = por %p54, %p55
      %p57 = scmp.ne.s32.totalorder %s49, %s52
      %p58 = scmp.eq.s32.totalorder %s14, 0
      %p59 = por %p57, %p58
      %p60 = scmp.ne.s32.totalorder %s49, %s52
      %p61 = scmp.eq.s32.totalorder %s19, 3
      %p62 = por %p60, %p61
      %p63 = scmp.ne.s32.totalorder %s52, %s53
      %p64 = scmp.eq.s32.totalorder %s19, 0
      %p65 = por %p63, %p64
      %p66 = scmp.ne.s32.totalorder %s52, %s53
      %p67 = scmp.eq.s32.totalorder %s20, 3
      %p68 = por %p66, %p67
      %p70 = scmp.ne.s32.totalorder %s53, %s69
      %p71 = scmp.eq.s32.totalorder %s20, 0
      %p72 = por %p70, %p71
      %s73 = smul.u32 %s22, 2
      %s74 = sadd.s32 %s73, %s23
      %s75 = smul.u32 %s36, 2
      %s76 = sadd.s32 %s75, %s32
      %s77 = ssub.s32 %s21, %s40
      %s78 = ssub.s32 %s74, %s76
      %s79 = sor.u32 %s77, %s78
      %p80 = scmp.eq.s32.totalorder %s79, 0
      %s82 = sadd.s32 %s81, 1
      %s83 = scalar_select %p80, %s81, %s82
      %p86 = pneg %p80
      %p87 = scmp.eq.s32.totalorder %s14, 3
      %p88 = por %p86, %p87
      %p89 = scmp.ne.s32.totalorder %s81, %s84
      %p90 = scmp.eq.s32.totalorder %s14, 0
      %p91 = por %p89, %p90
      %p92 = scmp.ne.s32.totalorder %s81, %s84
      %p93 = scmp.eq.s32.totalorder %s19, 3
      %p94 = por %p92, %p93
      %p95 = scmp.ne.s32.totalorder %s84, %s85
      %p96 = scmp.eq.s32.totalorder %s19, 0
      %p97 = por %p95, %p96
      %p98 = scmp.ne.s32.totalorder %s84, %s85
      %p99 = scmp.eq.s32.totalorder %s20, 3
      %p100 = por %p98, %p99
      %p102 = scmp.ne.s32.totalorder %s85, %s101
      %p103 = scmp.eq.s32.totalorder %s20, 0
      %p104 = por %p102, %p103
      %s105 = ssub.s32 %s21, %s40
      %s106 = ssub.s32 %s22, %s36
      %s107 = sor.u32 %s105, %s106
      %p108 = scmp.eq.s32.totalorder %s107, 0
      %s110 = sadd.s32 %s109, 1
      %s111 = scalar_select %p108, %s109, %s110
      %p114 = pneg %p108
      %p115 = scmp.eq.s32.totalorder %s14, 3
      %p116 = por %p114, %p115
      %p117 = scmp.ne.s32.totalorder %s109, %s112
      %p118 = scmp.eq.s32.totalorder %s14, 0
      %p119 = por %p117, %p118
      %p120 = scmp.ne.s32.totalorder %s109, %s112
      %p121 = scmp.eq.s32.totalorder %s19, 3
      %p122 = por %p120, %p121
      %p123 = scmp.ne.s32.totalorder %s112, %s113
      %p124 = scmp.eq.s32.totalorder %s19, 0
      %p125 = por %p123, %p124
      %p126 = scmp.ne.s32.totalorder %s112, %s113
      %p127 = scmp.eq.s32.totalorder %s20, 3
      %p128 = por %p126, %p127
      %p130 = scmp.ne.s32.totalorder %s113, %s129
      %p131 = scmp.eq.s32.totalorder %s20, 0
      %p132 = por %p130, %p131
      %p133 = scmp.le.s32.totalorder 1, %s14
      %p134 = scmp.lt.s32.totalorder %s14, 5
      %p135 = pnand %p133, %p134
      %p136 = pneg %p135
      // Predicated region
      $region9: #{tpu_custom_call.1} parent=5 // pred_check
        _
      $region10: #{tpu_custom_call.1} parent=5 // pred_check_branch
        %138 = sbr.rel (%p135) target = $region12
      $region11: #{tpu_custom_call.1} parent=5 // pred_region
        %s139 = ssub.s32 %s14, 1
      $region12: #{tpu_custom_call.1} parent=5 // pred_fallthru
        _
      %p140 = scmp.lt.s32.totalorder %s14, 4
      // Predicated region
      $region13: #{tpu_custom_call.1} parent=5 // pred_check
        %p141 = pneg %p140
      $region14: #{tpu_custom_call.1} parent=5 // pred_check_branch
        %143 = sbr.rel (%p141) target = $region16
      $region15: #{tpu_custom_call.1} parent=5 // pred_region
        // Predicated region
        $region17: #{tpu_custom_call.1} parent=15 // pred_check
          %p144 = pneg %p59
        $region18: #{tpu_custom_call.1} parent=15 // pred_check_branch
          %146 = sbr.rel (%p144) target = $region20
        $region19: #{tpu_custom_call.1} parent=15 // pred_region
          %s147 = sand.u32 %s49, 1
          %s148 = scalar_lea.sflag [#allocation4], %s147
          %s149 = sand.u32 %s49, 1
          %s150 = smul.addr %s149, 4
          %s151 = scalar_lea.vmem [#allocation3], %s150
          %s152 = smul.u32 %s22, 2
          %s153 = sadd.s32 %s152, %s23
          %s155 = ssub.s32 64, 64
          %156 = vsyncadd %s148, %s155
          %s157 = smul.addr %s21, 2
          %s158 = sadd.s32 %s153, %s157
          %s159 = smul.addr %s158, 64
          %s160 = scalar_lea.hbm %s0, %s159
          %s162 = sshll.u32 %s151, 4
          %s163 = int_to_ptr.vmem [resolvable:$true] %s162
          %165 = dma.hbm_to_vmem [thread:$0]  %s160, 64, %s163, %s148
        $region20: #{tpu_custom_call.1} parent=15 // pred_fallthru
          _
        // Predicated region
        $region21: #{tpu_custom_call.1} parent=15 // pred_check
          %p166 = pneg %p91
        $region22: #{tpu_custom_call.1} parent=15 // pred_check_branch
          %168 = sbr.rel (%p166) target = $region24
        $region23: #{tpu_custom_call.1} parent=15 // pred_region
          %s169 = sand.u32 %s81, 1
          %s170 = scalar_lea.sflag [#allocation6], %s169
          %s171 = sand.u32 %s81, 1
          %s172 = scalar_lea.vmem [#allocation5], %s171
          %s173 = smul.u32 %s22, 2
          %s174 = sadd.s32 %s173, %s23
          %s176 = ssub.s32 16, 16
          %177 = vsyncadd %s170, %s176
          %s178 = smul.addr %s21, 2
          %s179 = sadd.s32 %s174, %s178
          %s180 = smul.addr %s179, 16
          %s181 = scalar_lea.hbm %s1, %s180
          %s183 = sshll.u32 %s172, 4
          %s184 = int_to_ptr.vmem [resolvable:$true] %s183
          %186 = dma.hbm_to_vmem [thread:$0]  %s181, 16, %s184, %s170
        $region24: #{tpu_custom_call.1} parent=15 // pred_fallthru
          _
      $region16: #{tpu_custom_call.1} parent=5 // pred_fallthru
        _
      %p187 = scmp.le.s32.totalorder 1, %s14
      %p188 = scmp.lt.s32.totalorder %s14, 5
      %p189 = pnand %p187, %p188
      %p190 = pneg %p189
      // Predicated region
      $region25: #{tpu_custom_call.1} parent=5 // pred_check
        _
      $region26: #{tpu_custom_call.1} parent=5 // pred_check_branch
        %192 = sbr.rel (%p189) target = $region28
      $region27: #{tpu_custom_call.1} parent=5 // pred_region
        %s193 = ssub.s32 %s14, 1
        %s194 = sand.u32 %s52, 1
        %s195 = scalar_lea.sflag [#allocation4], %s194
        %s196 = sand.u32 %s52, 1
        %s197 = smul.addr %s196, 4
        %s198 = scalar_lea.vmem [#allocation3], %s197
        // Predicated region
        $region29: #{tpu_custom_call.1} parent=27 // pred_check
          %p199 = pneg %p65
        $region30: #{tpu_custom_call.1} parent=27 // pred_check_branch
          %201 = sbr.rel (%p199) target = $region32
        $region31: #{tpu_custom_call.1} parent=27 // pred_region
          %202 = dma.done %s195, 64
        $region32: #{tpu_custom_call.1} parent=27 // pred_fallthru
          _
        %s203 = sand.u32 %s84, 1
        %s204 = scalar_lea.sflag [#allocation6], %s203
        %s205 = sand.u32 %s84, 1
        %s206 = scalar_lea.vmem [#allocation5], %s205
        // Predicated region
        $region33: #{tpu_custom_call.1} parent=27 // pred_check
          %p207 = pneg %p97
        $region34: #{tpu_custom_call.1} parent=27 // pred_check_branch
          %209 = sbr.rel (%p207) target = $region36
        $region35: #{tpu_custom_call.1} parent=27 // pred_region
          %210 = dma.done %s204, 16
        $region36: #{tpu_custom_call.1} parent=27 // pred_fallthru
          _
        %s211 = sand.u32 %s52, 1
        %s212 = scalar_lea.sflag [#allocation4], %s211
        %s213 = sand.u32 %s52, 1
        %s214 = smul.addr %s213, 4
        %s215 = scalar_lea.vmem [#allocation3], %s214
        %p216 = pneg %p65
        %p217 = pneg %p62
        %s218 = sand.u32 %s84, 1
        %s219 = scalar_lea.sflag [#allocation6], %s218
        %s220 = sand.u32 %s84, 1
        %s221 = scalar_lea.vmem [#allocation5], %s220
        %p222 = pneg %p97
        %p223 = pneg %p94
        %p224 = pneg %p125
        %p225 = pneg %p122
        %p226 = scmp.lt.s32.totalorder %s24, 1
        %s227 = scalar_select %p226, %s24, 1
        %p228 = scmp.lt.s32.totalorder %s25, 0
        %s229 = scalar_select %p228, %s25, 0
        %s230 = sadd.s32 %s229, %s227
        %s231 = smul.addr %s230, 8
        %s232 = scalar_lea.vmem %s2, %s231
        %s233 = smul.u32 %s25, 2
        %s234 = sadd.s32 %s233, %s26
        %s235 = smul.u32 %s25, 2
        %s236 = sadd.s32 %s235, %s26
        %p237 = scmp.lt.s32.totalorder %s24, 1
        %s238 = scalar_select %p237, %s24, 1
        %p239 = scmp.lt.s32.totalorder %s25, 0
        %s240 = scalar_select %p239, %s25, 0
        %s241 = sadd.s32 %s240, %s238
        %s242 = smul.addr %s241, 8
        %s243 = scalar_lea.vmem %s2, %s242
        %p246 = scmp.eq.s32.totalorder %s26, 0
        // Predicated region
        $region37: #{tpu_custom_call.1} parent=27 // pred_check
          %p247 = pneg %p246
        $region38: #{tpu_custom_call.1} parent=27 // pred_check_branch
          %249 = sbr.rel (%p247) target = $region40
        $region39: #{tpu_custom_call.1} parent=27 // pred_region
          %vm250 = vcmask 126976
          %251 = vst.msk [vmem:[%s243] sm:$0x1f] %vm250, 0.0
          %vm252 = vcmask 1042434
          %vm253 = vsmask.f32 2304
          %vm254 = vmand %vm252, %vm253
          %v255 = vld [vmem:[#allocation2] sm:$0x4]
          %v256 = vsel %vm254, 1065369472, %v255
          %257 = vst [vmem:[#allocation2] sm:$0x4] %v256
        $region40: #{tpu_custom_call.1} parent=27 // pred_fallthru
          _
        %v258 = vld [vmem:[%s198] sm:$0xf]
        %v259 = vpack.c.bf16 %v258, %v258
        %260 = vst [vmem:[#allocation2] sm:$0x3] %v259
        %v261 = vld [vmem:[%s206] sm:$0x1]
        %v262 = vlaneseq
        %v263 = vshrl.u32 %v262, 7
        %v264 = vadd.s32 %v263, 8
        %v265 = vlaneseq
        %v266 = vshrl.u32 %v265, 7
        %v267 = vsub.s32 0, %v266
        %v268 = vrot.slane %v261, %v267
        %vm269 = vcmp.eq.s32.totalorder %v268, %v263
        %vm270 = vcmp.eq.s32.totalorder %v268, %v264
        %v271 = vsel %vm269, 1, 0
        %v272 = vsel %vm270, 1, 0
        %v273 = vcvt.s32.f32 %v271
        %v274 = vcvt.s32.f32 %v272
        %v275 = vpack.c.bf16 %v274, %v273
        %v276 = vld [vmem:[#allocation2] sm:$0x7]
        %277 = vmatprep.subr.bf16.mxu0 0
        %278 = vmatpush1.bf16.xpose.msra.mxu0 %v275
        %279 = vmatprep.subr.bf16.mxu0 0
        %280 = vmatpush1.bf16.xpose.msra.mxu0 0
        %281 = vmatprep.subr.bf16.mxu0 0
        %282 = vmatpush1.bf16.xpose.msra.mxu0 0
        %283 = vmatprep.subr.bf16.mxu0 0
        %284 = vmatpush1.bf16.xpose.msra.mxu0 0
        %285 = vmatprep.subr.bf16.mxu0 0
        %286 = vmatpush1.bf16.xpose.msra.mxu0 0
        %287 = vmatprep.subr.bf16.mxu0 0
        %288 = vmatpush1.bf16.xpose.msra.mxu0 0
        %289 = vmatprep.subr.bf16.mxu0 0
        %290 = vmatpush1.bf16.xpose.msra.mxu0 0
        %291 = vmatprep.subr.bf16.mxu0 0
        %292 = vmatpush1.bf16.xpose.msra.mxu0 0
        %293 = vmatprep.subr.bf16.mxu0 0
        %294 = vmatpush1.bf16.xpose.msra.mxu0 0
        %295 = vmatprep.subr.bf16.mxu0 0
        %296 = vmatpush1.bf16.xpose.msra.mxu0 0
        %297 = vmatprep.subr.bf16.mxu0 0
        %298 = vmatpush1.bf16.xpose.msra.mxu0 0
        %299 = vmatprep.subr.bf16.mxu0 0
        %300 = vmatpush1.bf16.xpose.msra.mxu0 0
        %301 = vmatprep.subr.bf16.mxu0 0
        %302 = vmatpush1.bf16.xpose.msra.mxu0 0
        %303 = vmatprep.subr.bf16.mxu0 0
        %304 = vmatpush1.bf16.xpose.msra.mxu0 0
        %305 = vmatprep.subr.bf16.mxu0 0
        %306 = vmatpush1.bf16.xpose.msra.mxu0 0
        %307 = vmatprep.subr.bf16.mxu0 0
        %308 = vmatpush1.bf16.xpose.msra.mxu0 0
        %309 = vmatprep.mubr.bf16.mxu0 0
        %310 = vmatmul.mubr.bf16.gmra.mrb[0].mxu0 %v276
        %v311 = vpop.f32.mrb[0].mxu0
        %v312 = vadd.f32 0.0, %v311
        %v313 = vpop.f32.mrb[0].mxu0
        %v314 = vpop.f32.mrb[0].mxu0
        %v315 = vpop.f32.mrb[0].mxu0
        %316 = vdwg.mxu0
        %v317 = vld [vmem:[%s243] sm:$0x1f]
        %v318 = vadd.f32 %v317, %v312
        %vm319 = vcmask 126976
        %320 = vst.msk [vmem:[%s243] sm:$0x1f] %vm319, %v318
        %p321 = scmp.lt.s32.totalorder %s24, 1
        %s322 = scalar_select %p321, %s24, 1
        %p323 = scmp.lt.s32.totalorder %s25, 0
        %s324 = scalar_select %p323, %s25, 0
        %s325 = sadd.s32 %s324, %s322
        %s326 = smul.addr %s325, 8
        %s327 = scalar_lea.vmem %s2, %s326
        // Predicated region
        $region41: #{tpu_custom_call.1} parent=27 // pred_check
          %p328 = pneg %p122
        $region42: #{tpu_custom_call.1} parent=27 // pred_check_branch
          %330 = sbr.rel (%p328) target = $region44
        $region43: #{tpu_custom_call.1} parent=27 // pred_region
          _
        $region44: #{tpu_custom_call.1} parent=27 // pred_fallthru
          _
      $region28: #{tpu_custom_call.1} parent=5 // pred_fallthru
        _
      %p331 = scmp.le.s32.totalorder 2, %s14
      // Predicated region
      $region45: #{tpu_custom_call.1} parent=5 // pred_check
        %p332 = pneg %p331
      $region46: #{tpu_custom_call.1} parent=5 // pred_check_branch
        %334 = sbr.rel (%p332) target = $region48
      $region47: #{tpu_custom_call.1} parent=5 // pred_region
        %s335 = ssub.s32 %s14, 2
        // Predicated region
        $region49: #{tpu_custom_call.1} parent=47 // pred_check
          %p336 = pneg %p128
        $region50: #{tpu_custom_call.1} parent=47 // pred_check_branch
          %338 = sbr.rel (%p336) target = $region52
        $region51: #{tpu_custom_call.1} parent=47 // pred_region
          %p339 = scmp.lt.s32.totalorder %s27, 1
          %s340 = scalar_select %p339, %s27, 1
          %p341 = scmp.lt.s32.totalorder %s28, 0
          %s342 = scalar_select %p341, %s28, 0
          %s343 = sadd.s32 %s342, %s340
          %s344 = smul.addr %s343, 8
          %s345 = scalar_lea.vmem %s2, %s344
        $region52: #{tpu_custom_call.1} parent=47 // pred_fallthru
          _
      $region48: #{tpu_custom_call.1} parent=5 // pred_fallthru
        _
    $region6: #{tpu_custom_call.1} parent=1 // loop_footer
      %s18 = sadd.s32 1, %s14
    $region7: #{tpu_custom_call.1} parent=1 // loop_footer_branch
      %13 = sbr.rel target = $region3
    $region8: #{tpu_custom_call.1} parent=1 // loop_exit
      _
    %346 = vsyncpa [#allocation4], 1
    %s347 = scalar_lea.sflag [#allocation4], 1
    %348 = vsyncpa %s347, 1
    %349 = vsyncpa [#allocation6], 1
    %s350 = scalar_lea.sflag [#allocation6], 1
    %351 = vsyncpa %s350, 1

</llo_original>
